<compile_context>
chip_gen: v7x
topology: tpu7x:2x2x1
jax: 0.10.0
libtpu: 0.0.40
codegen_flags: <defaults>
</compile_context>

<pallas_src>
import functools

import numpy as np
import jax
import jax.numpy as jnp
from jax.experimental import pallas as pl
from jax.experimental.pallas import tpu as pltpu

_LANE = 128  # TPU lane width


def _sublane_multiple(dtype) -> int:
    """Row-tile granularity: 8 for 32-bit, 16 for 16-bit, 32 for 8-bit dtypes."""
    bits = jnp.dtype(dtype).itemsize * 8
    return max(8, 256 // bits)


def _hw_params():
    """Per-generation tuning: per-step input-byte target, scoped VMEM limit,
    and minimum row-tile count (keep both v7x TensorCores busy)."""
    gen = None
    try:
        kind = jax.devices()[0].device_kind.lower()
        if any(t in kind for t in ("v7", "tpu7", "7x")):
            gen = 7
        elif any(t in kind for t in ("v6", "tpu6", "6e")):
            gen = 6
        elif any(t in kind for t in ("v5", "tpu5", "5e", "5p")):
            gen = 5
    except Exception:
        gen = None
    if gen == 7:
        # ~3.2 TB/s HBM -> larger per-step DMA; only 64 MiB physical VMEM.
        return {"step_in_bytes": 8 << 20, "vmem_limit": 48 << 20, "min_row_tiles": 4}
    if gen in (5, 6):
        # 128 MiB physical VMEM -> generous scoped limit, 4 MiB per-step reads.
        return {"step_in_bytes": 4 << 20, "vmem_limit": 64 << 20, "min_row_tiles": 1}
    return {"step_in_bytes": 2 << 20, "vmem_limit": 32 << 20, "min_row_tiles": 1}


def _pick_block_rows(r, cols_in, cols_out, itemsize, sub,
                     target_in_bytes, vmem_cap, min_row_tiles=1):
    """Rows per grid step: hit `target_in_bytes` of input DMA per step, stay
    under `vmem_cap` for double-buffered in+out blocks, keep >= min_row_tiles
    row tiles (when r allows), and respect the sublane multiple."""
    in_per_row = max(cols_in * itemsize, 1)
    out_per_row = max(cols_out * itemsize, 1)
    tr = target_in_bytes // in_per_row
    cap_rows = vmem_cap // (2 * (in_per_row + out_per_row))
    tr = min(tr, cap_rows)
    if min_row_tiles > 1 and r >= min_row_tiles * sub:
        tr = min(tr, -(-r // min_row_tiles))
    if tr >= r:
        return int(r)              # single full-extent block (always legal)
    tr = (tr // sub) * sub
    if tr < sub:
        tr = sub
    if tr > r:
        tr = r
    return int(tr)


# --------------------------- static index planning --------------------------


def _build_dense_runs(idxs):
    """Maximal (out_start, in_start, length) runs where output positions and
    source columns are both consecutive (pure static-slice copies)."""
    runs = []
    j, m = 0, len(idxs)
    while j < m:
        c0 = idxs[j]
        length = 1
        while j + length < m and idxs[j + length] == c0 + length:
            length += 1
        runs.append((j, c0, length))
        j += length
    return runs


def _build_groups(idxs, lane=_LANE):
    """Coalesce the sampled 128-lane tiles into alignment-safe groups.

    Each group is a dict with:
      start_tile, width_tiles : block is cols [start_tile*128, +width_tiles*128)
                                with start_tile % width_tiles == 0, so the
                                Blocked index is exactly start_tile//width_tiles.
      block_index             : static last-dim block index for its BlockSpec.
      runs                    : list of (out_start, in_offset, length) copy runs
                                (offsets relative to the group's first column).
    """
    tiles = sorted(set(c // lane for c in idxs))
    groups = []
    i = 0
    while i < len(tiles):
        t0 = tiles[i]
        g = 1
        while i + g < len(tiles) and tiles[i + g] == t0 + g:
            g += 1
        # aligned power-of-two split of the consecutive run [t0, t0+g)
        t, remaining = t0, g
        while remaining > 0:
            w = 1
            while (w * 2 <= remaining) and (t % (w * 2) == 0):
                w *= 2
            groups.append({"start_tile": t, "width_tiles": w,
                           "block_index": t // w, "runs": []})
            t += w
            remaining -= w
        i += g

    def group_of(col):
        t = col // lane
        for gi, grp in enumerate(groups):
            if grp["start_tile"] <= t < grp["start_tile"] + grp["width_tiles"]:
                return gi
        raise AssertionError("column not covered by any tile group")

    j, m = 0, len(idxs)
    while j < m:
        gi = group_of(idxs[j])
        grp = groups[gi]
        base = grp["start_tile"] * lane
        length = 1
        while (j + length < m
               and idxs[j + length] == idxs[j] + length
               and group_of(idxs[j + length]) == gi):
            length += 1
        grp["runs"].append((j, idxs[j] - base, length))
        j += length
    return groups


# --------------------------- kernels ----------------------------------------


def _qoi_dense_kernel(x_ref, o_ref, *, runs):
    """Dense path: x_ref is a (TR, n) row tile; copy sampled columns with
    static slices, one store per contiguous output run."""
    for out_start, in_start, length in runs:
        o_ref[:, out_start:out_start + length] = x_ref[:, in_start:in_start + length]


def _qoi_sparse_kernel(*refs, group_runs):
    """Sparse-read path: refs = (group_0, ..., group_{G-1}, out).  Each group
    ref is a (TR, W_g) lane-tile block holding only sampled columns; all groups
    are handled in a single grid step (one wide output block write)."""
    o_ref = refs[len(group_runs)]
    for g_ref, runs in zip(refs, group_runs):
        for out_start, in_off, length in runs:
            o_ref[:, out_start:out_start + length] = g_ref[:, in_off:in_off + length]


# --------------------------- module -----------------------------------------


class QoISampling1d:
    """Quantity of interest that evaluates the field at a given set of 1d points."""

    def __init__(self, sample_points):
        self.sample_points = np.asarray(sample_points)
        assert np.all(0 < self.sample_points) and np.all(self.sample_points < 1)

    @property
    def dim(self):
        return self.sample_points.shape[0]

    def __call__(self, x):
        n = x.shape[-1]
        # floor(n * p) as static integer indices (matches np.floor in torch ref)
        idxs = tuple(int(i) for i in np.floor(n * self.sample_points))
        assert all(0 <= i < n for i in idxs), (
            "sample point maps outside the field (floor(n*p) out of range)")
        m = len(idxs)

        lead = x.shape[:-1]
        r = int(np.prod(lead)) if lead else 1
        x2 = x.reshape(r, n)

        itemsize = jnp.dtype(x.dtype).itemsize
        sub = _sublane_multiple(x.dtype)
        hw = _hw_params()
        vmem_cap = int(hw["vmem_limit"] * 3 // 4)

        groups = _build_groups(idxs, _LANE)
        lanes_sparse = sum(g["width_tiles"] for g in groups) * _LANE

        # Dense block at minimal row count; if even that blows VMEM (very long
        # fields), force the sparse tile-read path.
        dense_min_bytes = 2 * sub * (n + m) * itemsize
        force_sparse = dense_min_bytes > vmem_cap
        # Sparse pays off once it reads <= ~1/1.1 of the dense full-row bytes.
        use_sparse = force_sparse or (lanes_sparse * 11 <= n * 10)

        if use_sparse:
            tr = _pick_block_rows(r, lanes_sparse, m, itemsize, sub,
                                  hw["step_in_bytes"], vmem_cap,
                                  hw["min_row_tiles"])
            kernel = functools.partial(
                _qoi_sparse_kernel, group_runs=[g["runs"] for g in groups])
            in_specs = [
                pl.BlockSpec((tr, g["width_tiles"] * _LANE),
                             lambda i, _b=g["block_index"]: (i, _b))
                for g in groups
            ]
            bytes_accessed = r * (lanes_sparse + m) * itemsize
            out = pl.pallas_call(
                kernel,
                out_shape=jax.ShapeDtypeStruct((r, m), x.dtype),
                grid=(pl.cdiv(r, tr),),
                in_specs=in_specs,
                out_specs=pl.BlockSpec((tr, m), lambda i: (i, 0)),
                compiler_params=pltpu.CompilerParams(
                    dimension_semantics=("parallel",),
                    vmem_limit_bytes=hw["vmem_limit"]),
                cost_estimate=pl.CostEstimate(
                    flops=0, transcendentals=0, bytes_accessed=bytes_accessed),
            )(*([x2] * len(groups)))
        else:
            tr = _pick_block_rows(r, n, m, itemsize, sub,
                                  hw["step_in_bytes"], vmem_cap,
                                  hw["min_row_tiles"])
            kernel = functools.partial(_qoi_dense_kernel,
                                       runs=_build_dense_runs(idxs))
            bytes_accessed = r * (n + m) * itemsize
            out = pl.pallas_call(
                kernel,
                out_shape=jax.ShapeDtypeStruct((r, m), x.dtype),
                grid=(pl.cdiv(r, tr),),
                in_specs=[pl.BlockSpec((tr, n), lambda i: (i, 0))],
                out_specs=pl.BlockSpec((tr, m), lambda i: (i, 0)),
                compiler_params=pltpu.CompilerParams(
                    dimension_semantics=("parallel",),
                    vmem_limit_bytes=hw["vmem_limit"]),
                cost_estimate=pl.CostEstimate(
                    flops=0, transcendentals=0, bytes_accessed=bytes_accessed),
            )(x2)

        return out.reshape(*lead, m)


# --------------------------- self-test ---------------------------------------

if __name__ == "__main__":
    key = jax.random.PRNGKey(0)
    k1, k2, k3, k4, k5 = jax.random.split(key, 5)

    def _reference(x, sample_points):
        n = x.shape[-1]
        ridx = jnp.asarray(np.floor(n * np.asarray(sample_points)).astype(np.int32))
        return jnp.take(x, ridx, axis=-1)

    # 1) Dense path, small n: batch=2, channels=4, n=16, 8 evenly spaced points.
    sp1 = (np.arange(8, dtype=np.float64) + 0.5) / 8.0
    qoi1 = QoISampling1d(sp1)
    x1 = jax.random.normal(k1, (2, 4, 16), dtype=jnp.float32)
    y1 = jax.block_until_ready(qoi1(x1))
    assert y1.shape == (2, 4, qoi1.dim), y1.shape
    np.testing.assert_array_equal(np.asarray(y1), np.asarray(_reference(x1, sp1)))

    # 2) Sparse tile-gather path: n=1024, clustered points -> 3 sampled tiles.
    sp2 = np.array([0.03, 0.05, 0.08, 0.51, 0.53, 0.97])
    qoi2 = QoISampling1d(sp2)
    x2 = jax.random.normal(k2, (2, 4, 1024), dtype=jnp.float32)
    y2 = jax.block_until_ready(qoi2(x2))
    assert y2.shape == (2, 4, qoi2.dim), y2.shape
    np.testing.assert_array_equal(np.asarray(y2), np.asarray(_reference(x2, sp2)))

    # 3) Dense fallback: n=1024 with points spread over every tile.
    sp3 = (np.arange(8, dtype=np.float64) + 0.5) / 8.0
    qoi3 = QoISampling1d(sp3)
    x3 = jax.random.normal(k3, (2, 4, 1024), dtype=jnp.float32)
    y3 = jax.block_until_ready(qoi3(x3))
    np.testing.assert_array_equal(np.asarray(y3), np.asarray(_reference(x3, sp3)))

    # 4) Sparse path edge cases: n=4000 (last sampled tile is a partial edge
    #    block), r=2800 rows (multiple row tiles, last one partial).
    sp4 = np.array([0.01, 0.012, 0.5, 0.995])
    qoi4 = QoISampling1d(sp4)
    x4 = jax.random.normal(k4, (28, 100, 4000), dtype=jnp.float32)
    y4 = jax.block_until_ready(qoi4(x4))
    assert y4.shape == (28, 100, qoi4.dim), y4.shape
    np.testing.assert_array_equal(np.asarray(y4), np.asarray(_reference(x4, sp4)))

    # 5) bf16 dense path (sublane multiple 16, row block equals full extent).
    sp5 = np.array([0.1, 0.4, 0.45, 0.9])
    qoi5 = QoISampling1d(sp5)
    x5 = jax.random.normal(k5, (2, 4, 16), dtype=jnp.bfloat16)
    y5 = jax.block_until_ready(qoi5(x5))
    np.testing.assert_array_equal(np.asarray(y5), np.asarray(_reference(x5, sp5)))

    print("KERNEL_OK")
</pallas_src>

<mosaic_0001>
module attributes {stable_mosaic.version = 11 : i64} {
  func.func @_qoi_dense_kernel(%arg0: i32, %arg1: memref<8x16xf32, #tpu.memory_space<vmem>>, %arg2: memref<8x8xf32, #tpu.memory_space<vmem>>) attributes {dimension_semantics = [#tpu.dimension_semantics<parallel>], iteration_bounds = array<i64: 1>, scalar_prefetch = 0 : i64, scratch_operands = 0 : i64, tpu.core_type = #tpu.core_type<tc>, window_params = [{transform_indices = @transform_0, window_bounds = array<i64: 8, 16>}, {transform_indices = @transform_1, window_bounds = array<i64: 8, 8>}]} {
    %c0 = arith.constant 0 : index
    %c1 = arith.constant 1 : index
    %0 = vector.load %arg1[%c0, %c1] : memref<8x16xf32, #tpu.memory_space<vmem>>, vector<8x1xf32>
    %c0_0 = arith.constant 0 : index
    %c0_1 = arith.constant 0 : index
    %1 = vector.load %arg2[%c0_0, %c0_1] : memref<8x8xf32, #tpu.memory_space<vmem>>, vector<8x1xf32>
    tpu.vector_store %arg2[%c0_0, %c0_1], %0 {strides = array<i32>} : memref<8x8xf32, #tpu.memory_space<vmem>>, vector<8x1xf32>,
    %c0_2 = arith.constant 0 : index
    %c3 = arith.constant 3 : index
    %2 = vector.load %arg1[%c0_2, %c3] : memref<8x16xf32, #tpu.memory_space<vmem>>, vector<8x1xf32>
    %c0_3 = arith.constant 0 : index
    %c1_4 = arith.constant 1 : index
    %3 = vector.load %arg2[%c0_3, %c1_4] : memref<8x8xf32, #tpu.memory_space<vmem>>, vector<8x1xf32>
    tpu.vector_store %arg2[%c0_3, %c1_4], %2 {strides = array<i32>} : memref<8x8xf32, #tpu.memory_space<vmem>>, vector<8x1xf32>,
    %c0_5 = arith.constant 0 : index
    %c5 = arith.constant 5 : index
    %4 = vector.load %arg1[%c0_5, %c5] : memref<8x16xf32, #tpu.memory_space<vmem>>, vector<8x1xf32>
    %c0_6 = arith.constant 0 : index
    %c2 = arith.constant 2 : index
    %5 = vector.load %arg2[%c0_6, %c2] : memref<8x8xf32, #tpu.memory_space<vmem>>, vector<8x1xf32>
    tpu.vector_store %arg2[%c0_6, %c2], %4 {strides = array<i32>} : memref<8x8xf32, #tpu.memory_space<vmem>>, vector<8x1xf32>,
    %c0_7 = arith.constant 0 : index
    %c7 = arith.constant 7 : index
    %6 = vector.load %arg1[%c0_7, %c7] : memref<8x16xf32, #tpu.memory_space<vmem>>, vector<8x1xf32>
    %c0_8 = arith.constant 0 : index
    %c3_9 = arith.constant 3 : index
    %7 = vector.load %arg2[%c0_8, %c3_9] : memref<8x8xf32, #tpu.memory_space<vmem>>, vector<8x1xf32>
    tpu.vector_store %arg2[%c0_8, %c3_9], %6 {strides = array<i32>} : memref<8x8xf32, #tpu.memory_space<vmem>>, vector<8x1xf32>,
    %c0_10 = arith.constant 0 : index
    %c9 = arith.constant 9 : index
    %8 = vector.load %arg1[%c0_10, %c9] : memref<8x16xf32, #tpu.memory_space<vmem>>, vector<8x1xf32>
    %c0_11 = arith.constant 0 : index
    %c4 = arith.constant 4 : index
    %9 = vector.load %arg2[%c0_11, %c4] : memref<8x8xf32, #tpu.memory_space<vmem>>, vector<8x1xf32>
    tpu.vector_store %arg2[%c0_11, %c4], %8 {strides = array<i32>} : memref<8x8xf32, #tpu.memory_space<vmem>>, vector<8x1xf32>,
    %c0_12 = arith.constant 0 : index
    %c11 = arith.constant 11 : index
    %10 = vector.load %arg1[%c0_12, %c11] : memref<8x16xf32, #tpu.memory_space<vmem>>, vector<8x1xf32>
    %c0_13 = arith.constant 0 : index
    %c5_14 = arith.constant 5 : index
    %11 = vector.load %arg2[%c0_13, %c5_14] : memref<8x8xf32, #tpu.memory_space<vmem>>, vector<8x1xf32>
    tpu.vector_store %arg2[%c0_13, %c5_14], %10 {strides = array<i32>} : memref<8x8xf32, #tpu.memory_space<vmem>>, vector<8x1xf32>,
    %c0_15 = arith.constant 0 : index
    %c13 = arith.constant 13 : index
    %12 = vector.load %arg1[%c0_15, %c13] : memref<8x16xf32, #tpu.memory_space<vmem>>, vector<8x1xf32>
    %c0_16 = arith.constant 0 : index
    %c6 = arith.constant 6 : index
    %13 = vector.load %arg2[%c0_16, %c6] : memref<8x8xf32, #tpu.memory_space<vmem>>, vector<8x1xf32>
    tpu.vector_store %arg2[%c0_16, %c6], %12 {strides = array<i32>} : memref<8x8xf32, #tpu.memory_space<vmem>>, vector<8x1xf32>,
    %c0_17 = arith.constant 0 : index
    %c15 = arith.constant 15 : index
    %14 = vector.load %arg1[%c0_17, %c15] : memref<8x16xf32, #tpu.memory_space<vmem>>, vector<8x1xf32>
    %c0_18 = arith.constant 0 : index
    %c7_19 = arith.constant 7 : index
    %15 = vector.load %arg2[%c0_18, %c7_19] : memref<8x8xf32, #tpu.memory_space<vmem>>, vector<8x1xf32>
    tpu.vector_store %arg2[%c0_18, %c7_19], %14 {strides = array<i32>} : memref<8x8xf32, #tpu.memory_space<vmem>>, vector<8x1xf32>,
    return
  }
  func.func @transform_0(%arg0: i32) -> (i32, i32) {
    %c0_i32 = arith.constant 0 : i32
    %c0_i32_0 = arith.constant 0 : i32
    return %arg0, %c0_i32 : i32, i32
  }
  func.func @transform_1(%arg0: i32) -> (i32, i32) {
    %c0_i32 = arith.constant 0 : i32
    %c0_i32_0 = arith.constant 0 : i32
    return %arg0, %c0_i32 : i32, i32
  }
}

</mosaic_0001>

<llo_original>
// kernel: tpu_custom_call.1
$region0: #{tpu_custom_call.1}
  #allocation0 [shape = 'u32[]', space=smem, size = 0x4, offset = 0x4, fixed_abs, tag = 'smem constant byte address 0x4 - core index']
  #allocation1 [shape = 'u32[144,128]{1,0:T(1,128)}', space=vmem, size = 0x12000, scoped, tag = 'internal scratch']
  %s0 = inlined_call_operand.hbm [shape: f32[8,16], index: 0, kind: input, shape index: {}]
  %s1 = inlined_call_operand.hbm [shape: f32[8,8], index: 1, kind: output, shape index: {}]
  %s2 = sld [smem:[#allocation0]]
  $region18: #{tpu_custom_call.1} parent=0
    _
  %s4 = ssub.s32 1, %s2
  %s5 = scalar_select 0, %s4, %s2
  $region1: #{tpu_custom_call.1} parent=0
    #allocation2 [shape = 'u8[4096]{0}', space=vmem, size = 0x1000, scoped, tag = 'input window, operand 0, single buffered']
    #allocation3 [shape = 's32[1]{0}', space=sflag, size = 0x4, scoped, tag = 'scoped memory for tpu_custom_call.1']
    #allocation4 [shape = 's32[1]{0}', space=sflag, size = 0x4, scoped, tag = 'scoped memory for tpu_custom_call.1']
    #allocation5 [shape = 'u8[4096]{0}', space=vmem, size = 0x1000, scoped, tag = 'output window, operand 0, single buffered']
    %6 = vsyncpa [#allocation3], 0
    %7 = vsyncpa [#allocation4], 0
    // Predicated region
    $region2: #{tpu_custom_call.1} parent=1 // pred_check
      _
    $region3: #{tpu_custom_call.1} parent=1 // pred_check_branch
      %9 = sbr.rel (0) target = $region5
    $region4: #{tpu_custom_call.1} parent=1 // pred_region
      %s11 = ssub.s32 128, 128
      %12 = vsyncadd [#allocation3], %s11
      %s14 = sshll.u32 [#allocation2], 4
      %s15 = int_to_ptr.vmem [resolvable:$true] %s14
      %17 = dma.hbm_to_vmem [thread:$0]  %s0, 128, %s15, [#allocation3]
    $region5: #{tpu_custom_call.1} parent=1 // pred_fallthru
      _
    // Predicated region
    $region6: #{tpu_custom_call.1} parent=1 // pred_check
      _
    $region7: #{tpu_custom_call.1} parent=1 // pred_check_branch
      %19 = sbr.rel (0) target = $region9
    $region8: #{tpu_custom_call.1} parent=1 // pred_region
      %20 = dma.done [#allocation3], 128
    $region9: #{tpu_custom_call.1} parent=1 // pred_fallthru
      _
    %v21 = vld [vmem:[#allocation2] sm:$0xff]
    %23 = vrot.lane.b32.xlu0 %v21, 127
    %v24 = vpop.permute.xlu0 %23
    %vm26 = vcmask 7168
    %27 = vst.msk [vmem:[#allocation5] sm:$0xff] %vm26, %v24
    %v28 = vld [vmem:[#allocation2] sm:$0xff]
    %30 = vrot.lane.b32.xlu0 %v28, 126
    %v31 = vpop.permute.xlu0 %30
    %vm33 = vcmask 15368
    %34 = vst.msk [vmem:[#allocation5] sm:$0xff] %vm33, %v31
    %v35 = vld [vmem:[#allocation2] sm:$0xff]
    %37 = vrot.lane.b32.xlu0 %v35, 125
    %v38 = vpop.permute.xlu0 %37
    %vm40 = vcmask 23568
    %41 = vst.msk [vmem:[#allocation5] sm:$0xff] %vm40, %v38
    %v42 = vld [vmem:[#allocation2] sm:$0xff]
    %44 = vrot.lane.b32.xlu0 %v42, 124
    %v45 = vpop.permute.xlu0 %44
    %vm47 = vcmask 31768
    %48 = vst.msk [vmem:[#allocation5] sm:$0xff] %vm47, %v45
    %v49 = vld [vmem:[#allocation2] sm:$0xff]
    %51 = vrot.lane.b32.xlu0 %v49, 123
    %v52 = vpop.permute.xlu0 %51
    %vm54 = vcmask 39968
    %55 = vst.msk [vmem:[#allocation5] sm:$0xff] %vm54, %v52
    %v56 = vld [vmem:[#allocation2] sm:$0xff]
    %58 = vrot.lane.b32.xlu0 %v56, 122
    %v59 = vpop.permute.xlu0 %58
    %vm61 = vcmask 48168
    %62 = vst.msk [vmem:[#allocation5] sm:$0xff] %vm61, %v59
    %v63 = vld [vmem:[#allocation2] sm:$0xff]
    %65 = vrot.lane.b32.xlu0 %v63, 121
    %v66 = vpop.permute.xlu0 %65
    %vm68 = vcmask 56368
    %69 = vst.msk [vmem:[#allocation5] sm:$0xff] %vm68, %v66
    %v70 = vld [vmem:[#allocation2] sm:$0xff]
    %72 = vrot.lane.b32.xlu0 %v70, 120
    %v73 = vpop.permute.xlu0 %72
    %vm75 = vcmask 64568
    %76 = vst.msk [vmem:[#allocation5] sm:$0xff] %vm75, %v73
    // Predicated region
    $region10: #{tpu_custom_call.1} parent=1 // pred_check
      _
    $region11: #{tpu_custom_call.1} parent=1 // pred_check_branch
      %78 = sbr.rel (0) target = $region13
    $region12: #{tpu_custom_call.1} parent=1 // pred_region
      %s80 = ssub.s32 128, 128
      %81 = vsyncadd [#allocation4], %s80
      %s83 = sshll.u32 [#allocation5], 4
      %s84 = int_to_ptr.vmem [resolvable:$true] %s83
      %86 = dma.vmem_to_hbm [thread:$0]  %s84, 128, %s1, [#allocation4]
    $region13: #{tpu_custom_call.1} parent=1 // pred_fallthru
      _
    // Predicated region
    $region14: #{tpu_custom_call.1} parent=1 // pred_check
      _
    $region15: #{tpu_custom_call.1} parent=1 // pred_check_branch
      %88 = sbr.rel (0) target = $region17
    $region16: #{tpu_custom_call.1} parent=1 // pred_region
      %89 = dma.done [#allocation4], 128
    $region17: #{tpu_custom_call.1} parent=1 // pred_fallthru
      _
    %90 = vsyncpa [#allocation3], 1
    %91 = vsyncpa [#allocation4], 1

</llo_original>
